<compile_context>
chip_gen: v6e
topology: v6e:2x2x1
jax: 0.10.0
libtpu: 0.0.40
codegen_flags: <defaults>
</compile_context>

<pallas_src>
import jax
import jax.numpy as jnp
import numpy as np
from jax import lax
from jax.experimental import pallas as pl
from jax.experimental.pallas import tpu as pltpu


# ----------------------------------------------------------------------------
# Pallas kernel: one time-chunk of the LSTM recurrence per grid step.
# Gate order has been pre-permuted to [i, f, o, g] (sigmoid lanes contiguous).
# ----------------------------------------------------------------------------
def _lstm_chunk_kernel(x_ref,      # (Tc*Bp, D)  raw inputs, time-major chunk
                       wi_ref,     # (D, 4H)     W_ih^T, f32
                       b_ref,      # (1, 4H)     b_ih + b_hh, f32
                       wh_ref,     # (H, 4H)     W_hh^T, bf16
                       hT_ref,     # (Bp, H)     output: last hidden state
                       xp_sc,      # (Tc*Bp, 4H) scratch: chunk x-projection
                       h_sc,       # (Bp, H)     scratch: h carry across chunks
                       c_sc):      # (Bp, H)     scratch: c carry across chunks
    chunk = pl.program_id(0)
    n_chunks = pl.num_programs(0)

    rows, G = xp_sc.shape
    Bp, H = h_sc.shape
    Tc = rows // Bp

    @pl.when(chunk == 0)
    def _():
        h_sc[...] = jnp.zeros_like(h_sc)
        c_sc[...] = jnp.zeros_like(c_sc)

    # Fused input projection for the whole chunk (off the serial path): the
    # (T,B,4H) slab is produced on-chip instead of round-tripping HBM.
    xp_sc[...] = (jnp.dot(x_ref[...], wi_ref[...],
                          preferred_element_type=jnp.float32) + b_ref[...])

    wh = wh_ref[...]                                     # hoisted, bf16

    # Hoisted per-lane constants (JAX does not CSE broadcast_in_dim).
    lane = lax.broadcasted_iota(jnp.int32, (Bp, G), 1)
    is_sig = lane < 3 * H                                # [i, f, o] lanes
    # sigmoid(x) = 0.5 * tanh(0.5 x) + 0.5  ->  one full-width tanh per step.
    pre_scale = jnp.where(is_sig, 0.5, 1.0).astype(jnp.float32)
    post_mul = jnp.where(is_sig, 0.5, 1.0).astype(jnp.float32)
    post_add = jnp.where(is_sig, 0.5, 0.0).astype(jnp.float32)

    def step(t, carry):
        h, c = carry
        row = pl.multiple_of(t * Bp, Bp)
        gates = xp_sc[pl.ds(row, Bp), :] + jnp.dot(
            h.astype(jnp.bfloat16), wh, preferred_element_type=jnp.float32)
        th = jnp.tanh(gates * pre_scale)                 # single EUP op / step
        act = th * post_mul + post_add                   # sigmoid / tanh merge
        i_g = act[:, 0 * H:1 * H]
        f_g = act[:, 1 * H:2 * H]
        o_g = act[:, 2 * H:3 * H]
        g_g = act[:, 3 * H:4 * H]
        c_new = f_g * c + i_g * g_g
        h_new = o_g * jnp.tanh(c_new)
        return h_new, c_new

    # Tc is capped (<= 8) by the wrapper, so a full unroll of the chunk stays
    # bounded regardless of total sequence length T.
    h_fin, c_fin = lax.fori_loop(0, Tc, step, (h_sc[...], c_sc[...]),
                                 unroll=True)
    h_sc[...] = h_fin
    c_sc[...] = c_fin

    @pl.when(chunk == n_chunks - 1)
    def _():
        hT_ref[...] = h_fin


# ----------------------------------------------------------------------------
# One-time parameter preparation (gate permutation, transpose, bias fusion,
# bf16 recurrent weights).
# ----------------------------------------------------------------------------
def _permute_gate_rows(w):
    """PyTorch gate order [i, f, g, o] along dim 0 -> [i, f, o, g]."""
    H = w.shape[0] // 4
    return jnp.concatenate([w[0:2 * H], w[3 * H:4 * H], w[2 * H:3 * H]], axis=0)


def prepare_params(params):
    H = params["w_hh"].shape[1]
    wi_t = jnp.transpose(_permute_gate_rows(params["w_ih"]))          # (D, 4H)
    wh_t = jnp.transpose(_permute_gate_rows(params["w_hh"]))          # (H, 4H)
    b = _permute_gate_rows(params["b_ih"] + params["b_hh"]).reshape(1, 4 * H)
    return {
        "wi_t": wi_t.astype(jnp.float32),
        "wh_t": wh_t.astype(jnp.bfloat16),      # bf16 MXU operand (f32 accum)
        "b": b.astype(jnp.float32),
        "wfc_t": jnp.transpose(params["w_fc"]),                       # (H, 1)
        "b_fc": params["b_fc"],                                       # (1,)
    }


def _pick_time_chunk(T, cap=8):
    """Largest divisor of T that is <= cap (>=1)."""
    for tc in range(min(T, cap), 0, -1):
        if T % tc == 0:
            return tc
    return 1


# ----------------------------------------------------------------------------
# Forward pass (matches LSTMModel.forward: fc applied to last hidden state).
# ----------------------------------------------------------------------------
@jax.jit
def lstm_model_forward(x, prep):
    """x: (B, T, D) float32, batch_first like the PyTorch module. -> (B, 1)."""
    B, T, D = x.shape
    H = prep["wh_t"].shape[0]
    G = 4 * H

    Bp = ((B + 7) // 8) * 8                    # pad batch to full sublanes
    Tc = _pick_time_chunk(T)                   # time chunk (static under jit)

    # Time-major, batch-padded, flattened to (T*Bp, D): the kernel's chunk
    # block is a plain lane-dense 2-D slab, no in-kernel reshape.
    x_tm = jnp.transpose(x, (1, 0, 2))                           # (T, B, D)
    x_tm = jnp.pad(x_tm, ((0, 0), (0, Bp - B), (0, 0)))          # (T, Bp, D)
    x_tm = x_tm.reshape(T * Bp, D)

    hT = pl.pallas_call(
        _lstm_chunk_kernel,
        out_shape=jax.ShapeDtypeStruct((Bp, H), jnp.float32),
        grid_spec=pltpu.PrefetchScalarGridSpec(
            num_scalar_prefetch=0,
            grid=(T // Tc,),
            in_specs=[
                pl.BlockSpec((Tc * Bp, D), lambda t: (t, 0)),    # x chunk
                pl.BlockSpec((D, G), lambda t: (0, 0)),          # W_ih^T
                pl.BlockSpec((1, G), lambda t: (0, 0)),          # fused bias
                pl.BlockSpec((H, G), lambda t: (0, 0)),          # W_hh^T bf16
            ],
            out_specs=pl.BlockSpec((Bp, H), lambda t: (0, 0)),
            scratch_shapes=[
                pltpu.VMEM((Tc * Bp, G), jnp.float32),   # chunk x-projection
                pltpu.VMEM((Bp, H), jnp.float32),        # h carry
                pltpu.VMEM((Bp, H), jnp.float32),        # c carry
            ],
        ),
        compiler_params=pltpu.CompilerParams(
            dimension_semantics=("arbitrary",)),
    )(x_tm, prep["wi_t"], prep["b"], prep["wh_t"])

    # Final (B,H)x(H,1) FC done by XLA: 1-lane output/weight tiles are
    # pathological inside a kernel and the FLOPs are negligible.
    return jnp.dot(hT[:B], prep["wfc_t"]) + prep["b_fc"]


# ----------------------------------------------------------------------------
# Pure-JAX reference (same math as torch.nn.LSTM + Linear) for verification.
# ----------------------------------------------------------------------------
def reference_forward(x, params):
    w_ih, w_hh, b_ih, b_hh, w_fc, b_fc = (
        params["w_ih"], params["w_hh"], params["b_ih"],
        params["b_hh"], params["w_fc"], params["b_fc"],
    )
    B, T, D = x.shape
    H = w_hh.shape[1]

    def step(carry, x_t):
        h, c = carry
        gates = x_t @ w_ih.T + b_ih + h @ w_hh.T + b_hh
        i = jax.nn.sigmoid(gates[:, 0 * H:1 * H])
        f = jax.nn.sigmoid(gates[:, 1 * H:2 * H])
        g = jnp.tanh(gates[:, 2 * H:3 * H])
        o = jax.nn.sigmoid(gates[:, 3 * H:4 * H])
        c_new = f * c + i * g
        h_new = o * jnp.tanh(c_new)
        return (h_new, c_new), None

    h0 = jnp.zeros((B, H), jnp.float32)
    c0 = jnp.zeros((B, H), jnp.float32)
    (h_T, _), _ = lax.scan(step, (h0, c0), jnp.transpose(x, (1, 0, 2)))
    return h_T @ w_fc.T + b_fc


# ----------------------------------------------------------------------------
# Deterministic parameter init (shapes from nn.LSTM(2, 64, 1) + nn.Linear(64,1))
# ----------------------------------------------------------------------------
def init_params(key, input_dim=2, hidden_dim=64):
    ks = jax.random.split(key, 6)
    bound = 1.0 / np.sqrt(hidden_dim)
    u = lambda k, shape: jax.random.uniform(
        k, shape, jnp.float32, minval=-bound, maxval=bound)
    return {
        "w_ih": u(ks[0], (4 * hidden_dim, input_dim)),
        "w_hh": u(ks[1], (4 * hidden_dim, hidden_dim)),
        "b_ih": u(ks[2], (4 * hidden_dim,)),
        "b_hh": u(ks[3], (4 * hidden_dim,)),
        "w_fc": u(ks[4], (1, hidden_dim)),
        "b_fc": u(ks[5], (1,)),
    }


if __name__ == "__main__":
    # Small shapes consistent with the module: input_dim=2, hidden_dim=64.
    # T=16 with Tc=8 exercises the cross-chunk h/c carry (grid of 2 steps).
    B, T, D, H = 2, 16, 2, 64

    key = jax.random.PRNGKey(0)
    k_param, k_x = jax.random.split(key)
    params = init_params(k_param, input_dim=D, hidden_dim=H)
    x = jax.random.normal(k_x, (B, T, D), jnp.float32)

    prep = prepare_params(params)              # one-time weight prep
    out = lstm_model_forward(x, prep)
    out = jax.block_until_ready(out)

    ref = reference_forward(x, params)
    # Tolerance loosened vs f32: the recurrent matmul uses bf16 MXU operands
    # (f32 accumulation), so error accumulates slightly over T steps.
    np.testing.assert_allclose(np.asarray(out), np.asarray(ref),
                               rtol=2e-2, atol=2e-2)
    assert out.shape == (B, 1)
    print("KERNEL_OK")
</pallas_src>

<mosaic_0001>
module attributes {stable_mosaic.version = 11 : i64} {
  func.func @_lstm_chunk_kernel(%arg0: i32, %arg1: memref<64x2xf32, #tpu.memory_space<vmem>>, %arg2: memref<2x256xf32, #tpu.memory_space<vmem>>, %arg3: memref<1x256xf32, #tpu.memory_space<vmem>>, %arg4: memref<64x256xbf16, #tpu.memory_space<vmem>>, %arg5: memref<8x64xf32, #tpu.memory_space<vmem>>, %arg6: memref<64x256xf32, #tpu.memory_space<vmem>>, %arg7: memref<8x64xf32, #tpu.memory_space<vmem>>, %arg8: memref<8x64xf32, #tpu.memory_space<vmem>>) attributes {dimension_semantics = [#tpu.dimension_semantics<arbitrary>], iteration_bounds = array<i64: 2>, scalar_prefetch = 0 : i64, scratch_operands = 3 : i64, tpu.core_type = #tpu.core_type<tc>, window_params = [{transform_indices = @transform_0, window_bounds = array<i64: 64, 2>}, {pipeline_mode = #tpu.pipeline_mode<synchronous>, transform_indices = @transform_1, window_bounds = array<i64: 2, 256>}, {pipeline_mode = #tpu.pipeline_mode<synchronous>, transform_indices = @transform_2, window_bounds = array<i64: 1, 256>}, {pipeline_mode = #tpu.pipeline_mode<synchronous>, transform_indices = @transform_3, window_bounds = array<i64: 64, 256>}, {pipeline_mode = #tpu.pipeline_mode<synchronous>, transform_indices = @transform_4, window_bounds = array<i64: 8, 64>}]} {
    %c0_i32 = arith.constant 0 : i32
    %0 = arith.cmpi eq, %arg0, %c0_i32 : i32
    %1 = arith.extui %0 : i1 to i32
    %c0_i32_0 = arith.constant 0 : i32
    %2 = arith.cmpi ne, %1, %c0_i32_0 : i32
    scf.if %2 {
      %cst_51 = arith.constant 0.000000e+00 : f32
      %190 = vector.broadcast %cst_51 : f32 to vector<8x64xf32>
      %c0_52 = arith.constant 0 : index
      %c0_53 = arith.constant 0 : index
      %191 = vector.load %arg7[%c0_52, %c0_53] : memref<8x64xf32, #tpu.memory_space<vmem>>, vector<8x64xf32>
      tpu.vector_store %arg7[%c0_52, %c0_53], %190 {strides = array<i32>} : memref<8x64xf32, #tpu.memory_space<vmem>>, vector<8x64xf32>,
      %cst_54 = arith.constant 0.000000e+00 : f32
      %192 = vector.broadcast %cst_54 : f32 to vector<8x64xf32>
      %c0_55 = arith.constant 0 : index
      %c0_56 = arith.constant 0 : index
      %193 = vector.load %arg8[%c0_55, %c0_56] : memref<8x64xf32, #tpu.memory_space<vmem>>, vector<8x64xf32>
      tpu.vector_store %arg8[%c0_55, %c0_56], %192 {strides = array<i32>} : memref<8x64xf32, #tpu.memory_space<vmem>>, vector<8x64xf32>,
    } else {
    }
    %c0 = arith.constant 0 : index
    %c0_1 = arith.constant 0 : index
    %3 = vector.load %arg1[%c0, %c0_1] : memref<64x2xf32, #tpu.memory_space<vmem>>, vector<64x2xf32>
    %c0_2 = arith.constant 0 : index
    %c0_3 = arith.constant 0 : index
    %4 = vector.load %arg2[%c0_2, %c0_3] : memref<2x256xf32, #tpu.memory_space<vmem>>, vector<2x256xf32>
    %cst = arith.constant dense<0.000000e+00> : vector<64x256xf32>
    %5 = tpu.matmul %3, %4, %cst {dimension_numbers = #tpu.dot_dimension_numbers<[1], [0], [0], [1], [0, 0, 1, 1], [], []>} : vector<64x2xf32>, vector<2x256xf32>, vector<64x256xf32> -> vector<64x256xf32>
    %c0_4 = arith.constant 0 : index
    %c0_5 = arith.constant 0 : index
    %6 = vector.load %arg3[%c0_4, %c0_5] : memref<1x256xf32, #tpu.memory_space<vmem>>, vector<1x256xf32>
    %7 = vector.broadcast %6 : vector<1x256xf32> to vector<64x256xf32>
    %8 = arith.addf %5, %7 : vector<64x256xf32>
    %c0_6 = arith.constant 0 : index
    %c0_7 = arith.constant 0 : index
    %9 = vector.load %arg6[%c0_6, %c0_7] : memref<64x256xf32, #tpu.memory_space<vmem>>, vector<64x256xf32>
    tpu.vector_store %arg6[%c0_6, %c0_7], %8 {strides = array<i32>} : memref<64x256xf32, #tpu.memory_space<vmem>>, vector<64x256xf32>,
    %c0_8 = arith.constant 0 : index
    %c0_9 = arith.constant 0 : index
    %10 = vector.load %arg4[%c0_8, %c0_9] : memref<64x256xbf16, #tpu.memory_space<vmem>>, vector<64x256xbf16>
    %11 = tpu.iota {dimensions = array<i32: 1>} : vector<8x256xi32>
    %c192_i32 = arith.constant 192 : i32
    %12 = vector.broadcast %c192_i32 : i32 to vector<8x256xi32>
    %13 = arith.cmpi slt, %11, %12 : vector<8x256xi32>
    %cst_10 = arith.constant 5.000000e-01 : f32
    %cst_11 = arith.constant 1.000000e+00 : f32
    %14 = vector.broadcast %cst_10 : f32 to vector<8x256xf32>
    %15 = vector.broadcast %cst_11 : f32 to vector<8x256xf32>
    %16 = arith.select %13, %14, %15 : vector<8x256xi1>, vector<8x256xf32>
    %cst_12 = arith.constant 5.000000e-01 : f32
    %cst_13 = arith.constant 1.000000e+00 : f32
    %17 = vector.broadcast %cst_12 : f32 to vector<8x256xf32>
    %18 = vector.broadcast %cst_13 : f32 to vector<8x256xf32>
    %19 = arith.select %13, %17, %18 : vector<8x256xi1>, vector<8x256xf32>
    %cst_14 = arith.constant 5.000000e-01 : f32
    %cst_15 = arith.constant 0.000000e+00 : f32
    %20 = vector.broadcast %cst_14 : f32 to vector<8x256xf32>
    %21 = vector.broadcast %cst_15 : f32 to vector<8x256xf32>
    %22 = arith.select %13, %20, %21 : vector<8x256xi1>, vector<8x256xf32>
    %c0_16 = arith.constant 0 : index
    %c0_17 = arith.constant 0 : index
    %23 = vector.load %arg7[%c0_16, %c0_17] : memref<8x64xf32, #tpu.memory_space<vmem>>, vector<8x64xf32>
    %c0_18 = arith.constant 0 : index
    %c0_19 = arith.constant 0 : index
    %24 = vector.load %arg8[%c0_18, %c0_19] : memref<8x64xf32, #tpu.memory_space<vmem>>, vector<8x64xf32>
    %c0_i32_20 = arith.constant 0 : i32
    %c8_i32 = arith.constant 8 : i32
    %25 = arith.muli %c0_i32_20, %c8_i32 : i32
    %26 = tpu.assume_multiple %25, 8 : i32
    %27 = arith.index_cast %26 : i32 to index
    %c0_21 = arith.constant 0 : index
    %28 = vector.load %arg6[%27, %c0_21] : memref<64x256xf32, #tpu.memory_space<vmem>>, vector<8x256xf32>
    %29 = arith.truncf %23 : vector<8x64xf32> to vector<8x64xbf16>
    %cst_22 = arith.constant dense<0.000000e+00> : vector<8x256xf32>
    %30 = tpu.matmul %29, %10, %cst_22 {dimension_numbers = #tpu.dot_dimension_numbers<[1], [0], [0], [1], [0, 0, 1, 1], [], []>} : vector<8x64xbf16>, vector<64x256xbf16>, vector<8x256xf32> -> vector<8x256xf32>
    %31 = arith.addf %28, %30 : vector<8x256xf32>
    %32 = arith.mulf %31, %16 : vector<8x256xf32>
    %33 = math.tanh %32 : vector<8x256xf32>
    %34 = arith.mulf %33, %19 : vector<8x256xf32>
    %35 = arith.addf %34, %22 : vector<8x256xf32>
    %36 = vector.extract_strided_slice %35 {offsets = [0, 0], sizes = [8, 64], strides = [1, 1]} : vector<8x256xf32> to vector<8x64xf32>
    %37 = vector.extract_strided_slice %35 {offsets = [0, 64], sizes = [8, 64], strides = [1, 1]} : vector<8x256xf32> to vector<8x64xf32>
    %38 = vector.extract_strided_slice %35 {offsets = [0, 128], sizes = [8, 64], strides = [1, 1]} : vector<8x256xf32> to vector<8x64xf32>
    %39 = vector.extract_strided_slice %35 {offsets = [0, 192], sizes = [8, 64], strides = [1, 1]} : vector<8x256xf32> to vector<8x64xf32>
    %40 = arith.mulf %37, %24 : vector<8x64xf32>
    %41 = arith.mulf %36, %39 : vector<8x64xf32>
    %42 = arith.addf %40, %41 : vector<8x64xf32>
    %43 = math.tanh %42 : vector<8x64xf32>
    %44 = arith.mulf %38, %43 : vector<8x64xf32>
    %c1_i32 = arith.constant 1 : i32
    %c8_i32_23 = arith.constant 8 : i32
    %45 = arith.muli %c1_i32, %c8_i32_23 : i32
    %46 = tpu.assume_multiple %45, 8 : i32
    %47 = arith.index_cast %46 : i32 to index
    %c0_24 = arith.constant 0 : index
    %48 = vector.load %arg6[%47, %c0_24] : memref<64x256xf32, #tpu.memory_space<vmem>>, vector<8x256xf32>
    %49 = arith.truncf %44 : vector<8x64xf32> to vector<8x64xbf16>
    %cst_25 = arith.constant dense<0.000000e+00> : vector<8x256xf32>
    %50 = tpu.matmul %49, %10, %cst_25 {dimension_numbers = #tpu.dot_dimension_numbers<[1], [0], [0], [1], [0, 0, 1, 1], [], []>} : vector<8x64xbf16>, vector<64x256xbf16>, vector<8x256xf32> -> vector<8x256xf32>
    %51 = arith.addf %48, %50 : vector<8x256xf32>
    %52 = arith.mulf %51, %16 : vector<8x256xf32>
    %53 = math.tanh %52 : vector<8x256xf32>
    %54 = arith.mulf %53, %19 : vector<8x256xf32>
    %55 = arith.addf %54, %22 : vector<8x256xf32>
    %56 = vector.extract_strided_slice %55 {offsets = [0, 0], sizes = [8, 64], strides = [1, 1]} : vector<8x256xf32> to vector<8x64xf32>
    %57 = vector.extract_strided_slice %55 {offsets = [0, 64], sizes = [8, 64], strides = [1, 1]} : vector<8x256xf32> to vector<8x64xf32>
    %58 = vector.extract_strided_slice %55 {offsets = [0, 128], sizes = [8, 64], strides = [1, 1]} : vector<8x256xf32> to vector<8x64xf32>
    %59 = vector.extract_strided_slice %55 {offsets = [0, 192], sizes = [8, 64], strides = [1, 1]} : vector<8x256xf32> to vector<8x64xf32>
    %60 = arith.mulf %57, %42 : vector<8x64xf32>
    %61 = arith.mulf %56, %59 : vector<8x64xf32>
    %62 = arith.addf %60, %61 : vector<8x64xf32>
    %63 = math.tanh %62 : vector<8x64xf32>
    %64 = arith.mulf %58, %63 : vector<8x64xf32>
    %c2_i32 = arith.constant 2 : i32
    %c8_i32_26 = arith.constant 8 : i32
    %65 = arith.muli %c2_i32, %c8_i32_26 : i32
    %66 = tpu.assume_multiple %65, 8 : i32
    %67 = arith.index_cast %66 : i32 to index
    %c0_27 = arith.constant 0 : index
    %68 = vector.load %arg6[%67, %c0_27] : memref<64x256xf32, #tpu.memory_space<vmem>>, vector<8x256xf32>
    %69 = arith.truncf %64 : vector<8x64xf32> to vector<8x64xbf16>
    %cst_28 = arith.constant dense<0.000000e+00> : vector<8x256xf32>
    %70 = tpu.matmul %69, %10, %cst_28 {dimension_numbers = #tpu.dot_dimension_numbers<[1], [0], [0], [1], [0, 0, 1, 1], [], []>} : vector<8x64xbf16>, vector<64x256xbf16>, vector<8x256xf32> -> vector<8x256xf32>
    %71 = arith.addf %68, %70 : vector<8x256xf32>
    %72 = arith.mulf %71, %16 : vector<8x256xf32>
    %73 = math.tanh %72 : vector<8x256xf32>
    %74 = arith.mulf %73, %19 : vector<8x256xf32>
    %75 = arith.addf %74, %22 : vector<8x256xf32>
    %76 = vector.extract_strided_slice %75 {offsets = [0, 0], sizes = [8, 64], strides = [1, 1]} : vector<8x256xf32> to vector<8x64xf32>
    %77 = vector.extract_strided_slice %75 {offsets = [0, 64], sizes = [8, 64], strides = [1, 1]} : vector<8x256xf32> to vector<8x64xf32>
    %78 = vector.extract_strided_slice %75 {offsets = [0, 128], sizes = [8, 64], strides = [1, 1]} : vector<8x256xf32> to vector<8x64xf32>
    %79 = vector.extract_strided_slice %75 {offsets = [0, 192], sizes = [8, 64], strides = [1, 1]} : vector<8x256xf32> to vector<8x64xf32>
    %80 = arith.mulf %77, %62 : vector<8x64xf32>
    %81 = arith.mulf %76, %79 : vector<8x64xf32>
    %82 = arith.addf %80, %81 : vector<8x64xf32>
    %83 = math.tanh %82 : vector<8x64xf32>
    %84 = arith.mulf %78, %83 : vector<8x64xf32>
    %c3_i32 = arith.constant 3 : i32
    %c8_i32_29 = arith.constant 8 : i32
    %85 = arith.muli %c3_i32, %c8_i32_29 : i32
    %86 = tpu.assume_multiple %85, 8 : i32
    %87 = arith.index_cast %86 : i32 to index
    %c0_30 = arith.constant 0 : index
    %88 = vector.load %arg6[%87, %c0_30] : memref<64x256xf32, #tpu.memory_space<vmem>>, vector<8x256xf32>
    %89 = arith.truncf %84 : vector<8x64xf32> to vector<8x64xbf16>
    %cst_31 = arith.constant dense<0.000000e+00> : vector<8x256xf32>
    %90 = tpu.matmul %89, %10, %cst_31 {dimension_numbers = #tpu.dot_dimension_numbers<[1], [0], [0], [1], [0, 0, 1, 1], [], []>} : vector<8x64xbf16>, vector<64x256xbf16>, vector<8x256xf32> -> vector<8x256xf32>
    %91 = arith.addf %88, %90 : vector<8x256xf32>
    %92 = arith.mulf %91, %16 : vector<8x256xf32>
    %93 = math.tanh %92 : vector<8x256xf32>
    %94 = arith.mulf %93, %19 : vector<8x256xf32>
    %95 = arith.addf %94, %22 : vector<8x256xf32>
    %96 = vector.extract_strided_slice %95 {offsets = [0, 0], sizes = [8, 64], strides = [1, 1]} : vector<8x256xf32> to vector<8x64xf32>
    %97 = vector.extract_strided_slice %95 {offsets = [0, 64], sizes = [8, 64], strides = [1, 1]} : vector<8x256xf32> to vector<8x64xf32>
    %98 = vector.extract_strided_slice %95 {offsets = [0, 128], sizes = [8, 64], strides = [1, 1]} : vector<8x256xf32> to vector<8x64xf32>
    %99 = vector.extract_strided_slice %95 {offsets = [0, 192], sizes = [8, 64], strides = [1, 1]} : vector<8x256xf32> to vector<8x64xf32>
    %100 = arith.mulf %97, %82 : vector<8x64xf32>
    %101 = arith.mulf %96, %99 : vector<8x64xf32>
    %102 = arith.addf %100, %101 : vector<8x64xf32>
    %103 = math.tanh %102 : vector<8x64xf32>
    %104 = arith.mulf %98, %103 : vector<8x64xf32>
    %c4_i32 = arith.constant 4 : i32
    %c8_i32_32 = arith.constant 8 : i32
    %105 = arith.muli %c4_i32, %c8_i32_32 : i32
    %106 = tpu.assume_multiple %105, 8 : i32
    %107 = arith.index_cast %106 : i32 to index
    %c0_33 = arith.constant 0 : index
    %108 = vector.load %arg6[%107, %c0_33] : memref<64x256xf32, #tpu.memory_space<vmem>>, vector<8x256xf32>
    %109 = arith.truncf %104 : vector<8x64xf32> to vector<8x64xbf16>
    %cst_34 = arith.constant dense<0.000000e+00> : vector<8x256xf32>
    %110 = tpu.matmul %109, %10, %cst_34 {dimension_numbers = #tpu.dot_dimension_numbers<[1], [0], [0], [1], [0, 0, 1, 1], [], []>} : vector<8x64xbf16>, vector<64x256xbf16>, vector<8x256xf32> -> vector<8x256xf32>
    %111 = arith.addf %108, %110 : vector<8x256xf32>
    %112 = arith.mulf %111, %16 : vector<8x256xf32>
    %113 = math.tanh %112 : vector<8x256xf32>
    %114 = arith.mulf %113, %19 : vector<8x256xf32>
    %115 = arith.addf %114, %22 : vector<8x256xf32>
    %116 = vector.extract_strided_slice %115 {offsets = [0, 0], sizes = [8, 64], strides = [1, 1]} : vector<8x256xf32> to vector<8x64xf32>
    %117 = vector.extract_strided_slice %115 {offsets = [0, 64], sizes = [8, 64], strides = [1, 1]} : vector<8x256xf32> to vector<8x64xf32>
    %118 = vector.extract_strided_slice %115 {offsets = [0, 128], sizes = [8, 64], strides = [1, 1]} : vector<8x256xf32> to vector<8x64xf32>
    %119 = vector.extract_strided_slice %115 {offsets = [0, 192], sizes = [8, 64], strides = [1, 1]} : vector<8x256xf32> to vector<8x64xf32>
    %120 = arith.mulf %117, %102 : vector<8x64xf32>
    %121 = arith.mulf %116, %119 : vector<8x64xf32>
    %122 = arith.addf %120, %121 : vector<8x64xf32>
    %123 = math.tanh %122 : vector<8x64xf32>
    %124 = arith.mulf %118, %123 : vector<8x64xf32>
    %c5_i32 = arith.constant 5 : i32
    %c8_i32_35 = arith.constant 8 : i32
    %125 = arith.muli %c5_i32, %c8_i32_35 : i32
    %126 = tpu.assume_multiple %125, 8 : i32
    %127 = arith.index_cast %126 : i32 to index
    %c0_36 = arith.constant 0 : index
    %128 = vector.load %arg6[%127, %c0_36] : memref<64x256xf32, #tpu.memory_space<vmem>>, vector<8x256xf32>
    %129 = arith.truncf %124 : vector<8x64xf32> to vector<8x64xbf16>
    %cst_37 = arith.constant dense<0.000000e+00> : vector<8x256xf32>
    %130 = tpu.matmul %129, %10, %cst_37 {dimension_numbers = #tpu.dot_dimension_numbers<[1], [0], [0], [1], [0, 0, 1, 1], [], []>} : vector<8x64xbf16>, vector<64x256xbf16>, vector<8x256xf32> -> vector<8x256xf32>
    %131 = arith.addf %128, %130 : vector<8x256xf32>
    %132 = arith.mulf %131, %16 : vector<8x256xf32>
    %133 = math.tanh %132 : vector<8x256xf32>
    %134 = arith.mulf %133, %19 : vector<8x256xf32>
    %135 = arith.addf %134, %22 : vector<8x256xf32>
    %136 = vector.extract_strided_slice %135 {offsets = [0, 0], sizes = [8, 64], strides = [1, 1]} : vector<8x256xf32> to vector<8x64xf32>
    %137 = vector.extract_strided_slice %135 {offsets = [0, 64], sizes = [8, 64], strides = [1, 1]} : vector<8x256xf32> to vector<8x64xf32>
    %138 = vector.extract_strided_slice %135 {offsets = [0, 128], sizes = [8, 64], strides = [1, 1]} : vector<8x256xf32> to vector<8x64xf32>
    %139 = vector.extract_strided_slice %135 {offsets = [0, 192], sizes = [8, 64], strides = [1, 1]} : vector<8x256xf32> to vector<8x64xf32>
    %140 = arith.mulf %137, %122 : vector<8x64xf32>
    %141 = arith.mulf %136, %139 : vector<8x64xf32>
    %142 = arith.addf %140, %141 : vector<8x64xf32>
    %143 = math.tanh %142 : vector<8x64xf32>
    %144 = arith.mulf %138, %143 : vector<8x64xf32>
    %c6_i32 = arith.constant 6 : i32
    %c8_i32_38 = arith.constant 8 : i32
    %145 = arith.muli %c6_i32, %c8_i32_38 : i32
    %146 = tpu.assume_multiple %145, 8 : i32
    %147 = arith.index_cast %146 : i32 to index
    %c0_39 = arith.constant 0 : index
    %148 = vector.load %arg6[%147, %c0_39] : memref<64x256xf32, #tpu.memory_space<vmem>>, vector<8x256xf32>
    %149 = arith.truncf %144 : vector<8x64xf32> to vector<8x64xbf16>
    %cst_40 = arith.constant dense<0.000000e+00> : vector<8x256xf32>
    %150 = tpu.matmul %149, %10, %cst_40 {dimension_numbers = #tpu.dot_dimension_numbers<[1], [0], [0], [1], [0, 0, 1, 1], [], []>} : vector<8x64xbf16>, vector<64x256xbf16>, vector<8x256xf32> -> vector<8x256xf32>
    %151 = arith.addf %148, %150 : vector<8x256xf32>
    %152 = arith.mulf %151, %16 : vector<8x256xf32>
    %153 = math.tanh %152 : vector<8x256xf32>
    %154 = arith.mulf %153, %19 : vector<8x256xf32>
    %155 = arith.addf %154, %22 : vector<8x256xf32>
    %156 = vector.extract_strided_slice %155 {offsets = [0, 0], sizes = [8, 64], strides = [1, 1]} : vector<8x256xf32> to vector<8x64xf32>
    %157 = vector.extract_strided_slice %155 {offsets = [0, 64], sizes = [8, 64], strides = [1, 1]} : vector<8x256xf32> to vector<8x64xf32>
    %158 = vector.extract_strided_slice %155 {offsets = [0, 128], sizes = [8, 64], strides = [1, 1]} : vector<8x256xf32> to vector<8x64xf32>
    %159 = vector.extract_strided_slice %155 {offsets = [0, 192], sizes = [8, 64], strides = [1, 1]} : vector<8x256xf32> to vector<8x64xf32>
    %160 = arith.mulf %157, %142 : vector<8x64xf32>
    %161 = arith.mulf %156, %159 : vector<8x64xf32>
    %162 = arith.addf %160, %161 : vector<8x64xf32>
    %163 = math.tanh %162 : vector<8x64xf32>
    %164 = arith.mulf %158, %163 : vector<8x64xf32>
    %c7_i32 = arith.constant 7 : i32
    %c8_i32_41 = arith.constant 8 : i32
    %165 = arith.muli %c7_i32, %c8_i32_41 : i32
    %166 = tpu.assume_multiple %165, 8 : i32
    %167 = arith.index_cast %166 : i32 to index
    %c0_42 = arith.constant 0 : index
    %168 = vector.load %arg6[%167, %c0_42] : memref<64x256xf32, #tpu.memory_space<vmem>>, vector<8x256xf32>
    %169 = arith.truncf %164 : vector<8x64xf32> to vector<8x64xbf16>
    %cst_43 = arith.constant dense<0.000000e+00> : vector<8x256xf32>
    %170 = tpu.matmul %169, %10, %cst_43 {dimension_numbers = #tpu.dot_dimension_numbers<[1], [0], [0], [1], [0, 0, 1, 1], [], []>} : vector<8x64xbf16>, vector<64x256xbf16>, vector<8x256xf32> -> vector<8x256xf32>
    %171 = arith.addf %168, %170 : vector<8x256xf32>
    %172 = arith.mulf %171, %16 : vector<8x256xf32>
    %173 = math.tanh %172 : vector<8x256xf32>
    %174 = arith.mulf %173, %19 : vector<8x256xf32>
    %175 = arith.addf %174, %22 : vector<8x256xf32>
    %176 = vector.extract_strided_slice %175 {offsets = [0, 0], sizes = [8, 64], strides = [1, 1]} : vector<8x256xf32> to vector<8x64xf32>
    %177 = vector.extract_strided_slice %175 {offsets = [0, 64], sizes = [8, 64], strides = [1, 1]} : vector<8x256xf32> to vector<8x64xf32>
    %178 = vector.extract_strided_slice %175 {offsets = [0, 128], sizes = [8, 64], strides = [1, 1]} : vector<8x256xf32> to vector<8x64xf32>
    %179 = vector.extract_strided_slice %175 {offsets = [0, 192], sizes = [8, 64], strides = [1, 1]} : vector<8x256xf32> to vector<8x64xf32>
    %180 = arith.mulf %177, %162 : vector<8x64xf32>
    %181 = arith.mulf %176, %179 : vector<8x64xf32>
    %182 = arith.addf %180, %181 : vector<8x64xf32>
    %183 = math.tanh %182 : vector<8x64xf32>
    %184 = arith.mulf %178, %183 : vector<8x64xf32>
    %c8_i32_44 = arith.constant 8 : i32
    %c0_45 = arith.constant 0 : index
    %c0_46 = arith.constant 0 : index
    %185 = vector.load %arg7[%c0_45, %c0_46] : memref<8x64xf32, #tpu.memory_space<vmem>>, vector<8x64xf32>
    tpu.vector_store %arg7[%c0_45, %c0_46], %184 {strides = array<i32>} : memref<8x64xf32, #tpu.memory_space<vmem>>, vector<8x64xf32>,
    %c0_47 = arith.constant 0 : index
    %c0_48 = arith.constant 0 : index
    %186 = vector.load %arg8[%c0_47, %c0_48] : memref<8x64xf32, #tpu.memory_space<vmem>>, vector<8x64xf32>
    tpu.vector_store %arg8[%c0_47, %c0_48], %182 {strides = array<i32>} : memref<8x64xf32, #tpu.memory_space<vmem>>, vector<8x64xf32>,
    %c1_i32_49 = arith.constant 1 : i32
    %187 = arith.cmpi eq, %arg0, %c1_i32_49 : i32
    %188 = arith.extui %187 : i1 to i32
    %c0_i32_50 = arith.constant 0 : i32
    %189 = arith.cmpi ne, %188, %c0_i32_50 : i32
    scf.if %189 {
      %c0_51 = arith.constant 0 : index
      %c0_52 = arith.constant 0 : index
      %190 = vector.load %arg5[%c0_51, %c0_52] : memref<8x64xf32, #tpu.memory_space<vmem>>, vector<8x64xf32>
      tpu.vector_store %arg5[%c0_51, %c0_52], %184 {strides = array<i32>} : memref<8x64xf32, #tpu.memory_space<vmem>>, vector<8x64xf32>,
    } else {
    }
    return
  }
  func.func @transform_0(%arg0: i32) -> (i32, i32) {
    %c0_i32 = arith.constant 0 : i32
    %c0_i32_0 = arith.constant 0 : i32
    return %arg0, %c0_i32 : i32, i32
  }
  func.func @transform_1(%arg0: i32) -> (i32, i32) {
    %c0_i32 = arith.constant 0 : i32
    %c0_i32_0 = arith.constant 0 : i32
    %c0_i32_1 = arith.constant 0 : i32
    return %c0_i32, %c0_i32_0 : i32, i32
  }
  func.func @transform_2(%arg0: i32) -> (i32, i32) {
    %c0_i32 = arith.constant 0 : i32
    %c0_i32_0 = arith.constant 0 : i32
    %c0_i32_1 = arith.constant 0 : i32
    return %c0_i32, %c0_i32_0 : i32, i32
  }
  func.func @transform_3(%arg0: i32) -> (i32, i32) {
    %c0_i32 = arith.constant 0 : i32
    %c0_i32_0 = arith.constant 0 : i32
    %c0_i32_1 = arith.constant 0 : i32
    return %c0_i32, %c0_i32_0 : i32, i32
  }
  func.func @transform_4(%arg0: i32) -> (i32, i32) {
    %c0_i32 = arith.constant 0 : i32
    %c0_i32_0 = arith.constant 0 : i32
    %c0_i32_1 = arith.constant 0 : i32
    return %c0_i32, %c0_i32_0 : i32, i32
  }
}

</mosaic_0001>

<llo_original>
// kernel: lstm_model_forward.1
$region0: #{lstm_model_forward.1}
  #allocation0 [shape = 'u32[]', space=smem, size = 0x4, offset = 0x4, fixed_abs, tag = 'smem constant byte address 0x4 - core index']
  #allocation1 [shape = 'u32[144,128]{1,0:T(1,128)}', space=vmem, size = 0x12000, scoped, tag = 'internal scratch']
  #allocation2 [shape = 'f32[64,256]{1,0:T(8,128)}', space=vmem, size = 0x10000, scoped, tag = 'scratch operand']
  #allocation3 [shape = 'f32[8,64]{1,0:T(8,128)}', space=vmem, size = 0x1000, scoped, tag = 'scratch operand']
  #allocation4 [shape = 'f32[8,64]{1,0:T(8,128)}', space=vmem, size = 0x1000, scoped, tag = 'scratch operand']
  %s0 = inlined_call_operand.vmem [shape: f32[128,2], index: 0, kind: input, shape index: {}]
  %s1 = inlined_call_operand.vmem [shape: f32[2,256], index: 1, kind: input, shape index: {}]
  %s2 = inlined_call_operand.vmem [shape: f32[1,256], index: 2, kind: input, shape index: {}]
  %s3 = inlined_call_operand.vmem [shape: bf16[64,256], index: 3, kind: input, shape index: {}]
  %s4 = inlined_call_operand.vmem [shape: f32[8,64], index: 4, kind: output, shape index: {}]
  %s5 = sld [smem:[#allocation0]]
  $region57: #{lstm_model_forward.1} parent=0
    _
  %s7 = ssub.s32 1, %s5
  %s8 = scalar_select 0, %s7, %s5
  loop: start=0, step=1, limit=4
  $region2: #{lstm_model_forward.1} parent=0 // loop_pre_header
    _
  $region3: #{lstm_model_forward.1} parent=0 // loop_header
    %s10 = sphi 0, %s14
    %p11 = scmp.ge.s32.totalorder %s10, 4
    %s20 = sphi 0, %s22
    %s23 = sphi 0, %s20
    %s24 = sphi 0, %s23
    %s40 = sphi 0, %s24
    %s44 = sphi 0, %s44
    %s46 = sphi 0, %s44
    %s47 = sphi 0, %s46
    %s61 = sphi 0, %s47
    %s65 = sphi 0, %s65
    %s67 = sphi 0, %s65
    %s68 = sphi 0, %s67
    %s82 = sphi 0, %s68
    %s86 = sphi 0, %s86
    %s88 = sphi 0, %s86
    %s89 = sphi 0, %s88
    %s103 = sphi 0, %s89
    %s107 = sphi 0, %s107
    %s109 = sphi 0, %s107
    %s110 = sphi 0, %s109
    %s124 = sphi 0, %s110
  $region4: #{lstm_model_forward.1} parent=0 // loop_header_branch
    %13 = sbr.rel (%p11) target = $region8
  $region5: #{lstm_model_forward.1} parent=0 // loop_body
    %s15 = ssub.s32 %s10, 1
    %s16 = ssub.s32 %s10, 2
    %s17 = sadd.s32 %s10, 1
    %s18 = ssub.s32 %s10, %s17
    %p19 = scmp.eq.s32.totalorder %s18, 0
    %s21 = sadd.s32 %s20, 1
    %s22 = scalar_select %p19, %s20, %s21
    %p25 = pneg %p19
    %p26 = scmp.eq.s32.totalorder %s10, 1
    %p27 = por %p25, %p26
    %p28 = scmp.ne.s32.totalorder %s20, %s23
    %p29 = scmp.eq.s32.totalorder %s10, 0
    %p30 = por %p28, %p29
    %p31 = scmp.ne.s32.totalorder %s20, %s23
    %p32 = scmp.eq.s32.totalorder %s15, 1
    %p33 = por %p31, %p32
    %p34 = scmp.ne.s32.totalorder %s23, %s24
    %p35 = scmp.eq.s32.totalorder %s15, 0
    %p36 = por %p34, %p35
    %p37 = scmp.ne.s32.totalorder %s23, %s24
    %p38 = scmp.eq.s32.totalorder %s16, 1
    %p39 = por %p37, %p38
    %p41 = scmp.ne.s32.totalorder %s24, %s40
    %p42 = scmp.eq.s32.totalorder %s16, 0
    %p43 = por %p41, %p42
    %s45 = sadd.s32 %s44, 1
    %p48 = scmp.eq.s32.totalorder %s10, 1
    %p49 = scmp.ne.s32.totalorder %s44, %s46
    %p50 = scmp.eq.s32.totalorder %s10, 0
    %p51 = por %p49, %p50
    %p52 = scmp.ne.s32.totalorder %s44, %s46
    %p53 = scmp.eq.s32.totalorder %s15, 1
    %p54 = por %p52, %p53
    %p55 = scmp.ne.s32.totalorder %s46, %s47
    %p56 = scmp.eq.s32.totalorder %s15, 0
    %p57 = por %p55, %p56
    %p58 = scmp.ne.s32.totalorder %s46, %s47
    %p59 = scmp.eq.s32.totalorder %s16, 1
    %p60 = por %p58, %p59
    %p62 = scmp.ne.s32.totalorder %s47, %s61
    %p63 = scmp.eq.s32.totalorder %s16, 0
    %p64 = por %p62, %p63
    %s66 = sadd.s32 %s65, 1
    %p69 = scmp.eq.s32.totalorder %s10, 1
    %p70 = scmp.ne.s32.totalorder %s65, %s67
    %p71 = scmp.eq.s32.totalorder %s10, 0
    %p72 = por %p70, %p71
    %p73 = scmp.ne.s32.totalorder %s65, %s67
    %p74 = scmp.eq.s32.totalorder %s15, 1
    %p75 = por %p73, %p74
    %p76 = scmp.ne.s32.totalorder %s67, %s68
    %p77 = scmp.eq.s32.totalorder %s15, 0
    %p78 = por %p76, %p77
    %p79 = scmp.ne.s32.totalorder %s67, %s68
    %p80 = scmp.eq.s32.totalorder %s16, 1
    %p81 = por %p79, %p80
    %p83 = scmp.ne.s32.totalorder %s68, %s82
    %p84 = scmp.eq.s32.totalorder %s16, 0
    %p85 = por %p83, %p84
    %s87 = sadd.s32 %s86, 1
    %p90 = scmp.eq.s32.totalorder %s10, 1
    %p91 = scmp.ne.s32.totalorder %s86, %s88
    %p92 = scmp.eq.s32.totalorder %s10, 0
    %p93 = por %p91, %p92
    %p94 = scmp.ne.s32.totalorder %s86, %s88
    %p95 = scmp.eq.s32.totalorder %s15, 1
    %p96 = por %p94, %p95
    %p97 = scmp.ne.s32.totalorder %s88, %s89
    %p98 = scmp.eq.s32.totalorder %s15, 0
    %p99 = por %p97, %p98
    %p100 = scmp.ne.s32.totalorder %s88, %s89
    %p101 = scmp.eq.s32.totalorder %s16, 1
    %p102 = por %p100, %p101
    %p104 = scmp.ne.s32.totalorder %s89, %s103
    %p105 = scmp.eq.s32.totalorder %s16, 0
    %p106 = por %p104, %p105
    %s108 = sadd.s32 %s107, 1
    %p111 = scmp.eq.s32.totalorder %s10, 1
    %p112 = scmp.ne.s32.totalorder %s107, %s109
    %p113 = scmp.eq.s32.totalorder %s10, 0
    %p114 = por %p112, %p113
    %p115 = scmp.ne.s32.totalorder %s107, %s109
    %p116 = scmp.eq.s32.totalorder %s15, 1
    %p117 = por %p115, %p116
    %p118 = scmp.ne.s32.totalorder %s109, %s110
    %p119 = scmp.eq.s32.totalorder %s15, 0
    %p120 = por %p118, %p119
    %p121 = scmp.ne.s32.totalorder %s109, %s110
    %p122 = scmp.eq.s32.totalorder %s16, 1
    %p123 = por %p121, %p122
    %p125 = scmp.ne.s32.totalorder %s110, %s124
    %p126 = scmp.eq.s32.totalorder %s16, 0
    %p127 = por %p125, %p126
    %p128 = scmp.le.s32.totalorder 1, %s10
    %p129 = scmp.lt.s32.totalorder %s10, 3
    %p130 = pnand %p128, %p129
    %p131 = pneg %p130
    // Predicated region
    $region9: #{lstm_model_forward.1} parent=5 // pred_check
      _
    $region10: #{lstm_model_forward.1} parent=5 // pred_check_branch
      %133 = sbr.rel (%p130) target = $region12
    $region11: #{lstm_model_forward.1} parent=5 // pred_region
      %s134 = ssub.s32 %s10, 1
      // Predicated region
      $region13: #{lstm_model_forward.1} parent=11 // pred_check
        %p135 = pneg %p57
      $region14: #{lstm_model_forward.1} parent=11 // pred_check_branch
        %137 = sbr.rel (%p135) target = $region16
      $region15: #{lstm_model_forward.1} parent=11 // pred_region
        _
      $region16: #{lstm_model_forward.1} parent=11 // pred_fallthru
        _
      // Predicated region
      $region17: #{lstm_model_forward.1} parent=11 // pred_check
        %p138 = pneg %p78
      $region18: #{lstm_model_forward.1} parent=11 // pred_check_branch
        %140 = sbr.rel (%p138) target = $region20
      $region19: #{lstm_model_forward.1} parent=11 // pred_region
        _
      $region20: #{lstm_model_forward.1} parent=11 // pred_fallthru
        _
      // Predicated region
      $region21: #{lstm_model_forward.1} parent=11 // pred_check
        %p141 = pneg %p99
      $region22: #{lstm_model_forward.1} parent=11 // pred_check_branch
        %143 = sbr.rel (%p141) target = $region24
      $region23: #{lstm_model_forward.1} parent=11 // pred_region
        _
      $region24: #{lstm_model_forward.1} parent=11 // pred_fallthru
        _
    $region12: #{lstm_model_forward.1} parent=5 // pred_fallthru
      _
    %p144 = scmp.lt.s32.totalorder %s10, 2
    // Predicated region
    $region25: #{lstm_model_forward.1} parent=5 // pred_check
      %p145 = pneg %p144
    $region26: #{lstm_model_forward.1} parent=5 // pred_check_branch
      %147 = sbr.rel (%p145) target = $region28
    $region27: #{lstm_model_forward.1} parent=5 // pred_region
      // Predicated region
      $region29: #{lstm_model_forward.1} parent=27 // pred_check
        %p148 = pneg %p30
      $region30: #{lstm_model_forward.1} parent=27 // pred_check_branch
        %150 = sbr.rel (%p148) target = $region32
      $region31: #{lstm_model_forward.1} parent=27 // pred_region
        %s151 = smul.u32 8, %s10
        %p152 = scmp.lt.s32.totalorder %s151, 15
        %s153 = scalar_select %p152, %s151, 15
        %s154 = smul.addr %s153, 8
        %s155 = scalar_lea.vmem %s0, %s154
        %s156 = smul.u32 8, %s10
      $region32: #{lstm_model_forward.1} parent=27 // pred_fallthru
        _
    $region28: #{lstm_model_forward.1} parent=5 // pred_fallthru
      _
    %p157 = scmp.le.s32.totalorder 1, %s10
    %p158 = scmp.lt.s32.totalorder %s10, 3
    %p159 = pnand %p157, %p158
    %p160 = pneg %p159
    // Predicated region
    $region33: #{lstm_model_forward.1} parent=5 // pred_check
      _
    $region34: #{lstm_model_forward.1} parent=5 // pred_check_branch
      %162 = sbr.rel (%p159) target = $region36
    $region35: #{lstm_model_forward.1} parent=5 // pred_region
      %s163 = ssub.s32 %s10, 1
      %s164 = smul.u32 8, %s15
      %p165 = scmp.lt.s32.totalorder %s164, 15
      %s166 = scalar_select %p165, %s164, 15
      %s167 = smul.addr %s166, 8
      %s168 = scalar_lea.vmem %s0, %s167
      %p169 = pneg %p36
      %p170 = pneg %p33
      %p171 = pneg %p57
      %p172 = pneg %p54
      %p173 = pneg %p78
      %p174 = pneg %p75
      %p175 = pneg %p99
      %p176 = pneg %p96
      %p177 = pneg %p120
      %p178 = pneg %p117
      %s179 = smul.u32 8, %s15
      %p180 = scmp.lt.s32.totalorder %s179, 15
      %s181 = scalar_select %p180, %s179, 15
      %s182 = smul.addr %s181, 8
      %s183 = scalar_lea.vmem %s0, %s182
      %s184 = smul.u32 8, %s15
      %p186 = scmp.eq.s32.totalorder %s15, 0
      // Predicated region
      $region37: #{lstm_model_forward.1} parent=35 // pred_check
        %p187 = pneg %p186
      $region38: #{lstm_model_forward.1} parent=35 // pred_check_branch
        %189 = sbr.rel (%p187) target = $region40
      $region39: #{lstm_model_forward.1} parent=35 // pred_region
        %vm190 = vcmask 523264
        %191 = vst.msk [vmem:[#allocation3] sm:$0xff] %vm190, 0.0
        %192 = vst.msk [vmem:[#allocation4] sm:$0xff] %vm190, 0.0
      $region40: #{lstm_model_forward.1} parent=35 // pred_fallthru
        _
      %v193 = vld [vmem:[%s183] sm:$0xff]
      %v194 = vld [vmem:[%s183 + $0x8] sm:$0xff]
      %v195 = vld [vmem:[%s183 + $0x10] sm:$0xff]
      %v196 = vld [vmem:[%s183 + $0x18] sm:$0xff]
      %v197 = vld [vmem:[%s183 + $0x20] sm:$0xff]
      %v198 = vld [vmem:[%s183 + $0x28] sm:$0xff]
      %v199 = vld [vmem:[%s183 + $0x30] sm:$0xff]
      %v200 = vld [vmem:[%s183 + $0x38] sm:$0xff]
      %v201 = vld [vmem:[%s1] sm:$0xf]
      %v202 = vld [vmem:[%s2] sm:$0x3]
      %v204 = vlaneseq
      %v205 = vshrl.u32 %v204, 7
      %v206 = vsub.s32 0, %v205
      %v207 = vrot.slane %v202, %v206
      %v208 = vlaneseq
      %v209 = vshrl.u32 %v208, 7
      %v210 = vsub.s32 1, %v209
      %v211 = vrot.slane %v202, %v210
      %v216 = vunpack.c.l.s4 1983009808
      %v217 = vunpack.c.0.s8 %v216
      %v218 = vlaneseq
      %v219 = vshrl.u32 %v218, 7
      %v220 = vsub.s32 %v217, %v219
      %v221 = vrot.slane %v201, %v220
      %v222 = vcombine.high %v221, %v221
      %vm223 = vcmask 15360
      %v225 = vsel %vm223, %v193, 0
      %v228 = vsel %vm223, %v194, 0
      %v231 = vsel %vm223, %v195, 0
      %v234 = vsel %vm223, %v196, 0
      %v237 = vsel %vm223, %v197, 0
      %v240 = vsel %vm223, %v198, 0
      %v243 = vsel %vm223, %v199, 0
      %v246 = vsel %vm223, %v200, 0
      %vm248 = vcmask 1041408
      %v249 = vsel %vm248, %v221, 0
      %v251 = vsel %vm248, %v222, 0
      %253 = vmatprep.subr.mxu0 0.0
      %254 = vmatpush1.msra.mxu0 0.0
      %255 = vmatprep.subr.mxu0 0.0
      %256 = vmatpush1.msra.mxu0 0.0
      %257 = vmatprep.subr.mxu0 0.0
      %258 = vmatpush1.msra.mxu0 0.0
      %259 = vmatprep.subr.mxu0 0.0
      %260 = vmatpush1.msra.mxu0 0.0
      %261 = vmatprep.subr.mxu0 0.0
      %262 = vmatpush1.msra.mxu0 0.0
      %263 = vmatprep.subr.mxu0 0.0
      %264 = vmatpush1.msra.mxu0 0.0
      %265 = vmatprep.subr.mxu0 0.0
      %266 = vmatpush1.msra.mxu0 0.0
      %267 = vmatprep.subr.mxu0 0.0
      %268 = vmatpush1.msra.mxu0 0.0
      %269 = vmatprep.subr.mxu0 0.0
      %270 = vmatpush1.msra.mxu0 0.0
      %271 = vmatprep.subr.mxu0 0.0
      %272 = vmatpush1.msra.mxu0 0.0
      %273 = vmatprep.subr.mxu0 0.0
      %274 = vmatpush1.msra.mxu0 0.0
      %275 = vmatprep.subr.mxu0 0.0
      %276 = vmatpush1.msra.mxu0 0.0
      %277 = vmatprep.subr.mxu0 0.0
      %278 = vmatpush1.msra.mxu0 0.0
      %279 = vmatprep.subr.mxu0 0.0
      %280 = vmatpush1.msra.mxu0 0.0
      %281 = vmatprep.subr.mxu0 0.0
      %282 = vmatpush1.msra.mxu0 0.0
      %283 = vmatprep.subr.mxu0 %v251
      %284 = vmatpush1.msra.mxu0 %v249
      %285 = vmatprep.subr.mxu0 0.0
      %286 = vmatpush2.msra.mxu0 0.0
      %287 = vmatprep.subr.mxu0 0.0
      %288 = vmatpush2.msra.mxu0 0.0
      %289 = vmatprep.subr.mxu0 0.0
      %290 = vmatpush2.msra.mxu0 0.0
      %291 = vmatprep.subr.mxu0 0.0
      %292 = vmatpush2.msra.mxu0 0.0
      %293 = vmatprep.subr.mxu0 0.0
      %294 = vmatpush2.msra.mxu0 0.0
      %295 = vmatprep.subr.mxu0 0.0
      %296 = vmatpush2.msra.mxu0 0.0
      %297 = vmatprep.subr.mxu0 0.0
      %298 = vmatpush2.msra.mxu0 0.0
      %299 = vmatprep.subr.mxu0 0.0
      %300 = vmatpush2.msra.mxu0 0.0
      %301 = vmatprep.subr.mxu0 0.0
      %302 = vmatpush2.msra.mxu0 0.0
      %303 = vmatprep.subr.mxu0 0.0
      %304 = vmatpush2.msra.mxu0 0.0
      %305 = vmatprep.subr.mxu0 0.0
      %306 = vmatpush2.msra.mxu0 0.0
      %307 = vmatprep.subr.mxu0 0.0
      %308 = vmatpush2.msra.mxu0 0.0
      %309 = vmatprep.subr.mxu0 0.0
      %310 = vmatpush2.msra.mxu0 0.0
      %311 = vmatprep.subr.mxu0 0.0
      %312 = vmatpush2.msra.mxu0 0.0
      %313 = vmatprep.subr.mxu0 0.0
      %314 = vmatpush2.msra.mxu0 0.0
      %315 = vmatprep.subr.mxu0 0.0
      %316 = vmatpush2.msra.mxu0 0.0
      %317 = vmatprep.mubr.f32.mxu0 0.0
      %318 = vmatmul.mubr.f32.gmra.mxu0 %v225
      %v319 = vpop.f32.mrf.mxu0
      %v320 = vadd.f32 %v207, %v319
      %v321 = vpop.f32.mrf.mxu0
      %v322 = vadd.f32 %v211, %v321
      %323 = vmatprep.mubr.f32.mxu0 0.0
      %324 = vmatmul.mubr.f32.gmra.mxu0 %v228
      %v325 = vpop.f32.mrf.mxu0
      %v326 = vadd.f32 %v207, %v325
      %v327 = vpop.f32.mrf.mxu0
      %v328 = vadd.f32 %v211, %v327
      %329 = vmatprep.mubr.f32.mxu0 0.0
      %330 = vmatmul.mubr.f32.gmra.mxu0 %v231
      %v331 = vpop.f32.mrf.mxu0
      %v332 = vadd.f32 %v207, %v331
      %v333 = vpop.f32.mrf.mxu0
      %v334 = vadd.f32 %v211, %v333
      %335 = vmatprep.mubr.f32.mxu0 0.0
      %336 = vmatmul.mubr.f32.gmra.mxu0 %v234
      %v337 = vpop.f32.mrf.mxu0
      %v338 = vadd.f32 %v207, %v337
      %v339 = vpop.f32.mrf.mxu0
      %v340 = vadd.f32 %v211, %v339
      %341 = vmatprep.mubr.f32.mxu0 0.0
      %342 = vmatmul.mubr.f32.gmra.mxu0 %v237
      %v343 = vpop.f32.mrf.mxu0
      %v344 = vadd.f32 %v207, %v343
      %v345 = vpop.f32.mrf.mxu0
      %v346 = vadd.f32 %v211, %v345
      %347 = vmatprep.mubr.f32.mxu0 0.0
      %348 = vmatmul.mubr.f32.gmra.mxu0 %v240
      %v349 = vpop.f32.mrf.mxu0
      %v350 = vadd.f32 %v207, %v349
      %v351 = vpop.f32.mrf.mxu0
      %v352 = vadd.f32 %v211, %v351
      %353 = vmatprep.mubr.f32.mxu0 0.0
      %354 = vmatmul.mubr.f32.gmra.mxu0 %v243
      %v355 = vpop.f32.mrf.mxu0
      %v356 = vadd.f32 %v207, %v355
      %v357 = vpop.f32.mrf.mxu0
      %v358 = vadd.f32 %v211, %v357
      %359 = vmatprep.mubr.f32.mxu0 0.0
      %360 = vmatmul.mubr.f32.gmra.mxu0 %v246
      %v361 = vpop.f32.mrf.mxu0
      %v362 = vadd.f32 %v207, %v361
      %v363 = vpop.f32.mrf.mxu0
      %v364 = vadd.f32 %v211, %v363
      %365 = vdwg.mxu0
      %366 = vst [vmem:[#allocation2] sm:$0xff] %v320
      %367 = vst [vmem:[#allocation2 + $0x8] sm:$0xff] %v322
      %368 = vst [vmem:[#allocation2 + $0x10] sm:$0xff] %v326
      %369 = vst [vmem:[#allocation2 + $0x18] sm:$0xff] %v328
      %370 = vst [vmem:[#allocation2 + $0x20] sm:$0xff] %v332
      %371 = vst [vmem:[#allocation2 + $0x28] sm:$0xff] %v334
      %372 = vst [vmem:[#allocation2 + $0x30] sm:$0xff] %v338
      %373 = vst [vmem:[#allocation2 + $0x38] sm:$0xff] %v340
      %374 = vst [vmem:[#allocation2 + $0x40] sm:$0xff] %v344
      %375 = vst [vmem:[#allocation2 + $0x48] sm:$0xff] %v346
      %376 = vst [vmem:[#allocation2 + $0x50] sm:$0xff] %v350
      %377 = vst [vmem:[#allocation2 + $0x58] sm:$0xff] %v352
      %378 = vst [vmem:[#allocation2 + $0x60] sm:$0xff] %v356
      %379 = vst [vmem:[#allocation2 + $0x68] sm:$0xff] %v358
      %380 = vst [vmem:[#allocation2 + $0x70] sm:$0xff] %v362
      %381 = vst [vmem:[#allocation2 + $0x78] sm:$0xff] %v364
      %v382 = vld [vmem:[%s3] sm:$0xff]
      %v383 = vld [vmem:[%s3 + $0x8] sm:$0xff]
      %v384 = vld [vmem:[%s3 + $0x10] sm:$0xff]
      %v385 = vld [vmem:[%s3 + $0x18] sm:$0xff]
      %v386 = vld [vmem:[%s3 + $0x20] sm:$0xff]
      %v387 = vld [vmem:[%s3 + $0x28] sm:$0xff]
      %v388 = vld [vmem:[%s3 + $0x30] sm:$0xff]
      %v389 = vld [vmem:[%s3 + $0x38] sm:$0xff]
      %v390 = vlaneseq
      %v391 = vand.u32 %v390, 127
      %v392 = vadd.s32 %v391, 128
      %vm393 = vcmp.lt.s32.totalorder %v391, 192
      %vm394 = vcmp.lt.s32.totalorder %v392, 192
      %v395 = vsel %vm393, 0.5, 1.0
      %v396 = vsel %vm394, 0.5, 1.0
      %v397 = vsel %vm393, 0.5, 0.0
      %v398 = vsel %vm394, 0.5, 0.0
      %v399 = vld [vmem:[#allocation3] sm:$0xff]
      %v400 = vld [vmem:[#allocation4] sm:$0xff]
      %s401 = smul.u32 0, 2
      %s402 = smul.addr %s401, 8
      %s403 = scalar_lea.vmem [#allocation2], %s402
      %v404 = vld [vmem:[%s403] sm:$0xff]
      %v405 = vld [vmem:[%s403 + $0x8] sm:$0xff]
      %v406 = vpack.c.bf16 %v399, %v399
      %v415 = vunpack.c.l.b16 %v382
      %v416 = vunpack.c.h.b16 %v382
      %v417 = vunpack.c.l.b16 %v383
      %v418 = vunpack.c.h.b16 %v383
      %v419 = vunpack.c.l.b16 %v384
      %v420 = vunpack.c.h.b16 %v384
      %v421 = vunpack.c.l.b16 %v385
      %v422 = vunpack.c.h.b16 %v385
      %v423 = vunpack.c.l.b16 %v386
      %v424 = vunpack.c.h.b16 %v386
      %v425 = vunpack.c.l.b16 %v387
      %v426 = vunpack.c.h.b16 %v387
      %v427 = vunpack.c.l.b16 %v388
      %v428 = vunpack.c.h.b16 %v388
      %v429 = vunpack.c.l.b16 %v389
      %v430 = vunpack.c.h.b16 %v389
      %v431 = vpack.c.b16 %v417, %v415
      %v432 = vpack.c.b16 %v418, %v416
      %v433 = vpack.c.b16 %v421, %v419
      %v434 = vpack.c.b16 %v422, %v420
      %v435 = vpack.c.b16 %v425, %v423
      %v436 = vpack.c.b16 %v426, %v424
      %v437 = vpack.c.b16 %v429, %v427
      %v438 = vpack.c.b16 %v430, %v428
      %vm447 = vcmask 523264
      %v449 = vsel %vm447, %v406, 0
      %451 = vmatprep.subr.bf16.mxu0 0
      %452 = vmatpush1.bf16.msra.mxu0 0
      %453 = vmatprep.subr.bf16.mxu0 0
      %454 = vmatpush1.bf16.msra.mxu0 0
      %455 = vmatprep.subr.bf16.mxu0 0
      %456 = vmatpush1.bf16.msra.mxu0 0
      %457 = vmatprep.subr.bf16.mxu0 0
      %458 = vmatpush1.bf16.msra.mxu0 0
      %459 = vmatprep.subr.bf16.mxu0 %v438
      %460 = vmatpush1.bf16.msra.mxu0 %v437
      %461 = vmatprep.subr.bf16.mxu0 %v436
      %462 = vmatpush1.bf16.msra.mxu0 %v435
      %463 = vmatprep.subr.bf16.mxu0 %v434
      %464 = vmatpush1.bf16.msra.mxu0 %v433
      %465 = vmatprep.subr.bf16.mxu0 %v432
      %466 = vmatpush1.bf16.msra.mxu0 %v431
      %467 = vmatprep.subr.bf16.mxu0 0
      %468 = vmatpush2.bf16.msra.mxu0 0
      %469 = vmatprep.subr.bf16.mxu0 0
      %470 = vmatpush2.bf16.msra.mxu0 0
      %471 = vmatprep.subr.bf16.mxu0 0
      %472 = vmatpush2.bf16.msra.mxu0 0
      %473 = vmatprep.subr.bf16.mxu0 0
      %474 = vmatpush2.bf16.msra.mxu0 0
      %475 = vmatprep.subr.bf16.mxu0 0
      %476 = vmatpush2.bf16.msra.mxu0 0
      %477 = vmatprep.subr.bf16.mxu0 0
      %478 = vmatpush2.bf16.msra.mxu0 0
      %479 = vmatprep.subr.bf16.mxu0 0
      %480 = vmatpush2.bf16.msra.mxu0 0
      %481 = vmatprep.subr.bf16.mxu0 0
      %482 = vmatpush2.bf16.msra.mxu0 0
      %483 = vmatprep.mubr.bf16.mxu0 0
      %484 = vmatmul.mubr.bf16.gmra.mxu0 %v449
      %v485 = vpop.f32.mrf.mxu0
      %v486 = vadd.f32 0.0, %v485
      %v487 = vpop.f32.mrf.mxu0
      %v488 = vadd.f32 0.0, %v487
      %v489 = vpop.f32.mrf.mxu0
      %v490 = vpop.f32.mrf.mxu0
      %491 = vdwg.mxu0
      %v492 = vadd.f32 %v404, %v486
      %v493 = vadd.f32 %v405, %v488
      %v494 = vmul.f32 %v492, %v395
      %v495 = vmul.f32 %v493, %v396
      %v496 = vtanh.pop %v494
      %v497 = vtanh.pop %v495
      %v498 = vmul.f32 %v496, %v395
      %v499 = vmul.f32 %v497, %v396
      %v500 = vadd.f32 %v498, %v397
      %v501 = vadd.f32 %v499, %v398
      %503 = vrot.lane.b32.xlu0 %v400, 64
      %v504 = vpop.permute.xlu0 %503
      %v506 = vmul.f32 %v500, %v504
      %508 = vrot.lane.b32.xlu0 %v501, 64
      %v509 = vpop.permute.xlu0 %508
      %v511 = vmul.f32 %v500, %v509
      %513 = vrot.lane.b32.xlu0 %v511, 64
      %v514 = vpop.permute.xlu0 %513
      %v516 = vadd.f32 %v506, %v514
      %v517 = vtanh.pop %v516
      %519 = vrot.lane.b32.xlu0 %v517, 64
      %v520 = vpop.permute.xlu0 %519
      %v522 = vmul.f32 %v501, %v520
      %s523 = smul.u32 1, 2
      %s524 = smul.addr %s523, 8
      %s525 = scalar_lea.vmem [#allocation2], %s524
      %v526 = vld [vmem:[%s525] sm:$0xff]
      %v527 = vld [vmem:[%s525 + $0x8] sm:$0xff]
      %v528 = vpack.c.bf16 %v522, %v522
      %v530 = vsel %vm447, %v528, 0
      %532 = vmatprep.subr.bf16.mxu0 0
      %533 = vmatpush1.bf16.msra.mxu0 0
      %534 = vmatprep.subr.bf16.mxu0 0
      %535 = vmatpush1.bf16.msra.mxu0 0
      %536 = vmatprep.subr.bf16.mxu0 0
      %537 = vmatpush1.bf16.msra.mxu0 0
      %538 = vmatprep.subr.bf16.mxu0 0
      %539 = vmatpush1.bf16.msra.mxu0 0
      %540 = vmatprep.subr.bf16.mxu0 %v438
      %541 = vmatpush1.bf16.msra.mxu0 %v437
      %542 = vmatprep.subr.bf16.mxu0 %v436
      %543 = vmatpush1.bf16.msra.mxu0 %v435
      %544 = vmatprep.subr.bf16.mxu0 %v434
      %545 = vmatpush1.bf16.msra.mxu0 %v433
      %546 = vmatprep.subr.bf16.mxu0 %v432
      %547 = vmatpush1.bf16.msra.mxu0 %v431
      %548 = vmatprep.subr.bf16.mxu0 0
      %549 = vmatpush2.bf16.msra.mxu0 0
      %550 = vmatprep.subr.bf16.mxu0 0
      %551 = vmatpush2.bf16.msra.mxu0 0
      %552 = vmatprep.subr.bf16.mxu0 0
      %553 = vmatpush2.bf16.msra.mxu0 0
      %554 = vmatprep.subr.bf16.mxu0 0
      %555 = vmatpush2.bf16.msra.mxu0 0
      %556 = vmatprep.subr.bf16.mxu0 0
      %557 = vmatpush2.bf16.msra.mxu0 0
      %558 = vmatprep.subr.bf16.mxu0 0
      %559 = vmatpush2.bf16.msra.mxu0 0
      %560 = vmatprep.subr.bf16.mxu0 0
      %561 = vmatpush2.bf16.msra.mxu0 0
      %562 = vmatprep.subr.bf16.mxu0 0
      %563 = vmatpush2.bf16.msra.mxu0 0
      %564 = vmatprep.mubr.bf16.mxu0 0
      %565 = vmatmul.mubr.bf16.gmra.mxu0 %v530
      %v566 = vpop.f32.mrf.mxu0
      %v567 = vadd.f32 0.0, %v566
      %v568 = vpop.f32.mrf.mxu0
      %v569 = vadd.f32 0.0, %v568
      %v570 = vpop.f32.mrf.mxu0
      %v571 = vpop.f32.mrf.mxu0
      %572 = vdwg.mxu0
      %v573 = vadd.f32 %v526, %v567
      %v574 = vadd.f32 %v527, %v569
      %v575 = vmul.f32 %v573, %v395
      %v576 = vmul.f32 %v574, %v396
      %v577 = vtanh.pop %v575
      %v578 = vtanh.pop %v576
      %v579 = vmul.f32 %v577, %v395
      %v580 = vmul.f32 %v578, %v396
      %v581 = vadd.f32 %v579, %v397
      %v582 = vadd.f32 %v580, %v398
      %v583 = vmul.f32 %v581, %v516
      %585 = vrot.lane.b32.xlu0 %v582, 64
      %v586 = vpop.permute.xlu0 %585
      %v588 = vmul.f32 %v581, %v586
      %590 = vrot.lane.b32.xlu0 %v588, 64
      %v591 = vpop.permute.xlu0 %590
      %v593 = vadd.f32 %v583, %v591
      %v594 = vtanh.pop %v593
      %596 = vrot.lane.b32.xlu0 %v594, 64
      %v597 = vpop.permute.xlu0 %596
      %v599 = vmul.f32 %v582, %v597
      %s600 = smul.u32 2, 2
      %s601 = smul.addr %s600, 8
      %s602 = scalar_lea.vmem [#allocation2], %s601
      %v603 = vld [vmem:[%s602] sm:$0xff]
      %v604 = vld [vmem:[%s602 + $0x8] sm:$0xff]
      %v605 = vpack.c.bf16 %v599, %v599
      %v607 = vsel %vm447, %v605, 0
      %609 = vmatprep.subr.bf16.mxu0 0
      %610 = vmatpush1.bf16.msra.mxu0 0
      %611 = vmatprep.subr.bf16.mxu0 0
      %612 = vmatpush1.bf16.msra.mxu0 0
      %613 = vmatprep.subr.bf16.mxu0 0
      %614 = vmatpush1.bf16.msra.mxu0 0
      %615 = vmatprep.subr.bf16.mxu0 0
      %616 = vmatpush1.bf16.msra.mxu0 0
      %617 = vmatprep.subr.bf16.mxu0 %v438
      %618 = vmatpush1.bf16.msra.mxu0 %v437
      %619 = vmatprep.subr.bf16.mxu0 %v436
      %620 = vmatpush1.bf16.msra.mxu0 %v435
      %621 = vmatprep.subr.bf16.mxu0 %v434
      %622 = vmatpush1.bf16.msra.mxu0 %v433
      %623 = vmatprep.subr.bf16.mxu0 %v432
      %624 = vmatpush1.bf16.msra.mxu0 %v431
      %625 = vmatprep.subr.bf16.mxu0 0
      %626 = vmatpush2.bf16.msra.mxu0 0
      %627 = vmatprep.subr.bf16.mxu0 0
      %628 = vmatpush2.bf16.msra.mxu0 0
      %629 = vmatprep.subr.bf16.mxu0 0
      %630 = vmatpush2.bf16.msra.mxu0 0
      %631 = vmatprep.subr.bf16.mxu0 0
      %632 = vmatpush2.bf16.msra.mxu0 0
      %633 = vmatprep.subr.bf16.mxu0 0
      %634 = vmatpush2.bf16.msra.mxu0 0
      %635 = vmatprep.subr.bf16.mxu0 0
      %636 = vmatpush2.bf16.msra.mxu0 0
      %637 = vmatprep.subr.bf16.mxu0 0
      %638 = vmatpush2.bf16.msra.mxu0 0
      %639 = vmatprep.subr.bf16.mxu0 0
      %640 = vmatpush2.bf16.msra.mxu0 0
      %641 = vmatprep.mubr.bf16.mxu0 0
      %642 = vmatmul.mubr.bf16.gmra.mxu0 %v607
      %v643 = vpop.f32.mrf.mxu0
      %v644 = vadd.f32 0.0, %v643
      %v645 = vpop.f32.mrf.mxu0
      %v646 = vadd.f32 0.0, %v645
      %v647 = vpop.f32.mrf.mxu0
      %v648 = vpop.f32.mrf.mxu0
      %649 = vdwg.mxu0
      %v650 = vadd.f32 %v603, %v644
      %v651 = vadd.f32 %v604, %v646
      %v652 = vmul.f32 %v650, %v395
      %v653 = vmul.f32 %v651, %v396
      %v654 = vtanh.pop %v652
      %v655 = vtanh.pop %v653
      %v656 = vmul.f32 %v654, %v395
      %v657 = vmul.f32 %v655, %v396
      %v658 = vadd.f32 %v656, %v397
      %v659 = vadd.f32 %v657, %v398
      %v660 = vmul.f32 %v658, %v593
      %662 = vrot.lane.b32.xlu0 %v659, 64
      %v663 = vpop.permute.xlu0 %662
      %v665 = vmul.f32 %v658, %v663
      %667 = vrot.lane.b32.xlu0 %v665, 64
      %v668 = vpop.permute.xlu0 %667
      %v670 = vadd.f32 %v660, %v668
      %v671 = vtanh.pop %v670
      %673 = vrot.lane.b32.xlu0 %v671, 64
      %v674 = vpop.permute.xlu0 %673
      %v676 = vmul.f32 %v659, %v674
      %s677 = smul.u32 3, 2
      %s678 = smul.addr %s677, 8
      %s679 = scalar_lea.vmem [#allocation2], %s678
      %v680 = vld [vmem:[%s679] sm:$0xff]
      %v681 = vld [vmem:[%s679 + $0x8] sm:$0xff]
      %v682 = vpack.c.bf16 %v676, %v676
      %v684 = vsel %vm447, %v682, 0
      %686 = vmatprep.subr.bf16.mxu0 0
      %687 = vmatpush1.bf16.msra.mxu0 0
      %688 = vmatprep.subr.bf16.mxu0 0
      %689 = vmatpush1.bf16.msra.mxu0 0
      %690 = vmatprep.subr.bf16.mxu0 0
      %691 = vmatpush1.bf16.msra.mxu0 0
      %692 = vmatprep.subr.bf16.mxu0 0
      %693 = vmatpush1.bf16.msra.mxu0 0
      %694 = vmatprep.subr.bf16.mxu0 %v438
      %695 = vmatpush1.bf16.msra.mxu0 %v437
      %696 = vmatprep.subr.bf16.mxu0 %v436
      %697 = vmatpush1.bf16.msra.mxu0 %v435
      %698 = vmatprep.subr.bf16.mxu0 %v434
      %699 = vmatpush1.bf16.msra.mxu0 %v433
      %700 = vmatprep.subr.bf16.mxu0 %v432
      %701 = vmatpush1.bf16.msra.mxu0 %v431
      %702 = vmatprep.subr.bf16.mxu0 0
      %703 = vmatpush2.bf16.msra.mxu0 0
      %704 = vmatprep.subr.bf16.mxu0 0
      %705 = vmatpush2.bf16.msra.mxu0 0
      %706 = vmatprep.subr.bf16.mxu0 0
      %707 = vmatpush2.bf16.msra.mxu0 0
      %708 = vmatprep.subr.bf16.mxu0 0
      %709 = vmatpush2.bf16.msra.mxu0 0
      %710 = vmatprep.subr.bf16.mxu0 0
      %711 = vmatpush2.bf16.msra.mxu0 0
      %712 = vmatprep.subr.bf16.mxu0 0
      %713 = vmatpush2.bf16.msra.mxu0 0
      %714 = vmatprep.subr.bf16.mxu0 0
      %715 = vmatpush2.bf16.msra.mxu0 0
      %716 = vmatprep.subr.bf16.mxu0 0
      %717 = vmatpush2.bf16.msra.mxu0 0
      %718 = vmatprep.mubr.bf16.mxu0 0
      %719 = vmatmul.mubr.bf16.gmra.mxu0 %v684
      %v720 = vpop.f32.mrf.mxu0
      %v721 = vadd.f32 0.0, %v720
      %v722 = vpop.f32.mrf.mxu0
      %v723 = vadd.f32 0.0, %v722
      %v724 = vpop.f32.mrf.mxu0
      %v725 = vpop.f32.mrf.mxu0
      %726 = vdwg.mxu0
      %v727 = vadd.f32 %v680, %v721
      %v728 = vadd.f32 %v681, %v723
      %v729 = vmul.f32 %v727, %v395
      %v730 = vmul.f32 %v728, %v396
      %v731 = vtanh.pop %v729
      %v732 = vtanh.pop %v730
      %v733 = vmul.f32 %v731, %v395
      %v734 = vmul.f32 %v732, %v396
      %v735 = vadd.f32 %v733, %v397
      %v736 = vadd.f32 %v734, %v398
      %v737 = vmul.f32 %v735, %v670
      %739 = vrot.lane.b32.xlu0 %v736, 64
      %v740 = vpop.permute.xlu0 %739
      %v742 = vmul.f32 %v735, %v740
      %744 = vrot.lane.b32.xlu0 %v742, 64
      %v745 = vpop.permute.xlu0 %744
      %v747 = vadd.f32 %v737, %v745
      %v748 = vtanh.pop %v747
      %750 = vrot.lane.b32.xlu0 %v748, 64
      %v751 = vpop.permute.xlu0 %750
      %v753 = vmul.f32 %v736, %v751
      %s754 = smul.u32 4, 2
      %s755 = smul.addr %s754, 8
      %s756 = scalar_lea.vmem [#allocation2], %s755
      %v757 = vld [vmem:[%s756] sm:$0xff]
      %v758 = vld [vmem:[%s756 + $0x8] sm:$0xff]
      %v759 = vpack.c.bf16 %v753, %v753
      %v761 = vsel %vm447, %v759, 0
      %763 = vmatprep.subr.bf16.mxu0 0
      %764 = vmatpush1.bf16.msra.mxu0 0
      %765 = vmatprep.subr.bf16.mxu0 0
      %766 = vmatpush1.bf16.msra.mxu0 0
      %767 = vmatprep.subr.bf16.mxu0 0
      %768 = vmatpush1.bf16.msra.mxu0 0
      %769 = vmatprep.subr.bf16.mxu0 0
      %770 = vmatpush1.bf16.msra.mxu0 0
      %771 = vmatprep.subr.bf16.mxu0 %v438
      %772 = vmatpush1.bf16.msra.mxu0 %v437
      %773 = vmatprep.subr.bf16.mxu0 %v436
      %774 = vmatpush1.bf16.msra.mxu0 %v435
      %775 = vmatprep.subr.bf16.mxu0 %v434
      %776 = vmatpush1.bf16.msra.mxu0 %v433
      %777 = vmatprep.subr.bf16.mxu0 %v432
      %778 = vmatpush1.bf16.msra.mxu0 %v431
      %779 = vmatprep.subr.bf16.mxu0 0
      %780 = vmatpush2.bf16.msra.mxu0 0
      %781 = vmatprep.subr.bf16.mxu0 0
      %782 = vmatpush2.bf16.msra.mxu0 0
      %783 = vmatprep.subr.bf16.mxu0 0
      %784 = vmatpush2.bf16.msra.mxu0 0
      %785 = vmatprep.subr.bf16.mxu0 0
      %786 = vmatpush2.bf16.msra.mxu0 0
      %787 = vmatprep.subr.bf16.mxu0 0
      %788 = vmatpush2.bf16.msra.mxu0 0
      %789 = vmatprep.subr.bf16.mxu0 0
      %790 = vmatpush2.bf16.msra.mxu0 0
      %791 = vmatprep.subr.bf16.mxu0 0
      %792 = vmatpush2.bf16.msra.mxu0 0
      %793 = vmatprep.subr.bf16.mxu0 0
      %794 = vmatpush2.bf16.msra.mxu0 0
      %795 = vmatprep.mubr.bf16.mxu0 0
      %796 = vmatmul.mubr.bf16.gmra.mxu0 %v761
      %v797 = vpop.f32.mrf.mxu0
      %v798 = vadd.f32 0.0, %v797
      %v799 = vpop.f32.mrf.mxu0
      %v800 = vadd.f32 0.0, %v799
      %v801 = vpop.f32.mrf.mxu0
      %v802 = vpop.f32.mrf.mxu0
      %803 = vdwg.mxu0
      %v804 = vadd.f32 %v757, %v798
      %v805 = vadd.f32 %v758, %v800
      %v806 = vmul.f32 %v804, %v395
      %v807 = vmul.f32 %v805, %v396
      %v808 = vtanh.pop %v806
      %v809 = vtanh.pop %v807
      %v810 = vmul.f32 %v808, %v395
      %v811 = vmul.f32 %v809, %v396
      %v812 = vadd.f32 %v810, %v397
      %v813 = vadd.f32 %v811, %v398
      %v814 = vmul.f32 %v812, %v747
      %816 = vrot.lane.b32.xlu0 %v813, 64
      %v817 = vpop.permute.xlu0 %816
      %v819 = vmul.f32 %v812, %v817
      %821 = vrot.lane.b32.xlu0 %v819, 64
      %v822 = vpop.permute.xlu0 %821
      %v824 = vadd.f32 %v814, %v822
      %v825 = vtanh.pop %v824
      %827 = vrot.lane.b32.xlu0 %v825, 64
      %v828 = vpop.permute.xlu0 %827
      %v830 = vmul.f32 %v813, %v828
      %s831 = smul.u32 5, 2
      %s832 = smul.addr %s831, 8
      %s833 = scalar_lea.vmem [#allocation2], %s832
      %v834 = vld [vmem:[%s833] sm:$0xff]
      %v835 = vld [vmem:[%s833 + $0x8] sm:$0xff]
      %v836 = vpack.c.bf16 %v830, %v830
      %v838 = vsel %vm447, %v836, 0
      %840 = vmatprep.subr.bf16.mxu0 0
      %841 = vmatpush1.bf16.msra.mxu0 0
      %842 = vmatprep.subr.bf16.mxu0 0
      %843 = vmatpush1.bf16.msra.mxu0 0
      %844 = vmatprep.subr.bf16.mxu0 0
      %845 = vmatpush1.bf16.msra.mxu0 0
      %846 = vmatprep.subr.bf16.mxu0 0
      %847 = vmatpush1.bf16.msra.mxu0 0
      %848 = vmatprep.subr.bf16.mxu0 %v438
      %849 = vmatpush1.bf16.msra.mxu0 %v437
      %850 = vmatprep.subr.bf16.mxu0 %v436
      %851 = vmatpush1.bf16.msra.mxu0 %v435
      %852 = vmatprep.subr.bf16.mxu0 %v434
      %853 = vmatpush1.bf16.msra.mxu0 %v433
      %854 = vmatprep.subr.bf16.mxu0 %v432
      %855 = vmatpush1.bf16.msra.mxu0 %v431
      %856 = vmatprep.subr.bf16.mxu0 0
      %857 = vmatpush2.bf16.msra.mxu0 0
      %858 = vmatprep.subr.bf16.mxu0 0
      %859 = vmatpush2.bf16.msra.mxu0 0
      %860 = vmatprep.subr.bf16.mxu0 0
      %861 = vmatpush2.bf16.msra.mxu0 0
      %862 = vmatprep.subr.bf16.mxu0 0
      %863 = vmatpush2.bf16.msra.mxu0 0
      %864 = vmatprep.subr.bf16.mxu0 0
      %865 = vmatpush2.bf16.msra.mxu0 0
      %866 = vmatprep.subr.bf16.mxu0 0
      %867 = vmatpush2.bf16.msra.mxu0 0
      %868 = vmatprep.subr.bf16.mxu0 0
      %869 = vmatpush2.bf16.msra.mxu0 0
      %870 = vmatprep.subr.bf16.mxu0 0
      %871 = vmatpush2.bf16.msra.mxu0 0
      %872 = vmatprep.mubr.bf16.mxu0 0
      %873 = vmatmul.mubr.bf16.gmra.mxu0 %v838
      %v874 = vpop.f32.mrf.mxu0
      %v875 = vadd.f32 0.0, %v874
      %v876 = vpop.f32.mrf.mxu0
      %v877 = vadd.f32 0.0, %v876
      %v878 = vpop.f32.mrf.mxu0
      %v879 = vpop.f32.mrf.mxu0
      %880 = vdwg.mxu0
      %v881 = vadd.f32 %v834, %v875
      %v882 = vadd.f32 %v835, %v877
      %v883 = vmul.f32 %v881, %v395
      %v884 = vmul.f32 %v882, %v396
      %v885 = vtanh.pop %v883
      %v886 = vtanh.pop %v884
      %v887 = vmul.f32 %v885, %v395
      %v888 = vmul.f32 %v886, %v396
      %v889 = vadd.f32 %v887, %v397
      %v890 = vadd.f32 %v888, %v398
      %v891 = vmul.f32 %v889, %v824
      %893 = vrot.lane.b32.xlu0 %v890, 64
      %v894 = vpop.permute.xlu0 %893
      %v896 = vmul.f32 %v889, %v894
      %898 = vrot.lane.b32.xlu0 %v896, 64
      %v899 = vpop.permute.xlu0 %898
      %v901 = vadd.f32 %v891, %v899
      %v902 = vtanh.pop %v901
      %904 = vrot.lane.b32.xlu0 %v902, 64
      %v905 = vpop.permute.xlu0 %904
      %v907 = vmul.f32 %v890, %v905
      %s908 = smul.u32 6, 2
      %s909 = smul.addr %s908, 8
      %s910 = scalar_lea.vmem [#allocation2], %s909
      %v911 = vld [vmem:[%s910] sm:$0xff]
      %v912 = vld [vmem:[%s910 + $0x8] sm:$0xff]
      %v913 = vpack.c.bf16 %v907, %v907
      %v915 = vsel %vm447, %v913, 0
      %917 = vmatprep.subr.bf16.mxu0 0
      %918 = vmatpush1.bf16.msra.mxu0 0
      %919 = vmatprep.subr.bf16.mxu0 0
      %920 = vmatpush1.bf16.msra.mxu0 0
      %921 = vmatprep.subr.bf16.mxu0 0
      %922 = vmatpush1.bf16.msra.mxu0 0
      %923 = vmatprep.subr.bf16.mxu0 0
      %924 = vmatpush1.bf16.msra.mxu0 0
      %925 = vmatprep.subr.bf16.mxu0 %v438
      %926 = vmatpush1.bf16.msra.mxu0 %v437
      %927 = vmatprep.subr.bf16.mxu0 %v436
      %928 = vmatpush1.bf16.msra.mxu0 %v435
      %929 = vmatprep.subr.bf16.mxu0 %v434
      %930 = vmatpush1.bf16.msra.mxu0 %v433
      %931 = vmatprep.subr.bf16.mxu0 %v432
      %932 = vmatpush1.bf16.msra.mxu0 %v431
      %933 = vmatprep.subr.bf16.mxu0 0
      %934 = vmatpush2.bf16.msra.mxu0 0
      %935 = vmatprep.subr.bf16.mxu0 0
      %936 = vmatpush2.bf16.msra.mxu0 0
      %937 = vmatprep.subr.bf16.mxu0 0
      %938 = vmatpush2.bf16.msra.mxu0 0
      %939 = vmatprep.subr.bf16.mxu0 0
      %940 = vmatpush2.bf16.msra.mxu0 0
      %941 = vmatprep.subr.bf16.mxu0 0
      %942 = vmatpush2.bf16.msra.mxu0 0
      %943 = vmatprep.subr.bf16.mxu0 0
      %944 = vmatpush2.bf16.msra.mxu0 0
      %945 = vmatprep.subr.bf16.mxu0 0
      %946 = vmatpush2.bf16.msra.mxu0 0
      %947 = vmatprep.subr.bf16.mxu0 0
      %948 = vmatpush2.bf16.msra.mxu0 0
      %949 = vmatprep.mubr.bf16.mxu0 0
      %950 = vmatmul.mubr.bf16.gmra.mxu0 %v915
      %v951 = vpop.f32.mrf.mxu0
      %v952 = vadd.f32 0.0, %v951
      %v953 = vpop.f32.mrf.mxu0
      %v954 = vadd.f32 0.0, %v953
      %v955 = vpop.f32.mrf.mxu0
      %v956 = vpop.f32.mrf.mxu0
      %957 = vdwg.mxu0
      %v958 = vadd.f32 %v911, %v952
      %v959 = vadd.f32 %v912, %v954
      %v960 = vmul.f32 %v958, %v395
      %v961 = vmul.f32 %v959, %v396
      %v962 = vtanh.pop %v960
      %v963 = vtanh.pop %v961
      %v964 = vmul.f32 %v962, %v395
      %v965 = vmul.f32 %v963, %v396
      %v966 = vadd.f32 %v964, %v397
      %v967 = vadd.f32 %v965, %v398
      %v968 = vmul.f32 %v966, %v901
      %970 = vrot.lane.b32.xlu0 %v967, 64
      %v971 = vpop.permute.xlu0 %970
      %v973 = vmul.f32 %v966, %v971
      %975 = vrot.lane.b32.xlu0 %v973, 64
      %v976 = vpop.permute.xlu0 %975
      %v978 = vadd.f32 %v968, %v976
      %v979 = vtanh.pop %v978
      %981 = vrot.lane.b32.xlu0 %v979, 64
      %v982 = vpop.permute.xlu0 %981
      %v984 = vmul.f32 %v967, %v982
      %s985 = smul.u32 7, 2
      %s986 = smul.addr %s985, 8
      %s987 = scalar_lea.vmem [#allocation2], %s986
      %v988 = vld [vmem:[%s987] sm:$0xff]
      %v989 = vld [vmem:[%s987 + $0x8] sm:$0xff]
      %v990 = vpack.c.bf16 %v984, %v984
      %v992 = vsel %vm447, %v990, 0
      %994 = vmatprep.subr.bf16.mxu0 0
      %995 = vmatpush1.bf16.msra.mxu0 0
      %996 = vmatprep.subr.bf16.mxu0 0
      %997 = vmatpush1.bf16.msra.mxu0 0
      %998 = vmatprep.subr.bf16.mxu0 0
      %999 = vmatpush1.bf16.msra.mxu0 0
      %1000 = vmatprep.subr.bf16.mxu0 0
      %1001 = vmatpush1.bf16.msra.mxu0 0
      %1002 = vmatprep.subr.bf16.mxu0 %v438
      %1003 = vmatpush1.bf16.msra.mxu0 %v437
      %1004 = vmatprep.subr.bf16.mxu0 %v436
      %1005 = vmatpush1.bf16.msra.mxu0 %v435
      %1006 = vmatprep.subr.bf16.mxu0 %v434
      %1007 = vmatpush1.bf16.msra.mxu0 %v433
      %1008 = vmatprep.subr.bf16.mxu0 %v432
      %1009 = vmatpush1.bf16.msra.mxu0 %v431
      %1010 = vmatprep.subr.bf16.mxu0 0
      %1011 = vmatpush2.bf16.msra.mxu0 0
      %1012 = vmatprep.subr.bf16.mxu0 0
      %1013 = vmatpush2.bf16.msra.mxu0 0
      %1014 = vmatprep.subr.bf16.mxu0 0
      %1015 = vmatpush2.bf16.msra.mxu0 0
      %1016 = vmatprep.subr.bf16.mxu0 0
      %1017 = vmatpush2.bf16.msra.mxu0 0
      %1018 = vmatprep.subr.bf16.mxu0 0
      %1019 = vmatpush2.bf16.msra.mxu0 0
      %1020 = vmatprep.subr.bf16.mxu0 0
      %1021 = vmatpush2.bf16.msra.mxu0 0
      %1022 = vmatprep.subr.bf16.mxu0 0
      %1023 = vmatpush2.bf16.msra.mxu0 0
      %1024 = vmatprep.subr.bf16.mxu0 0
      %1025 = vmatpush2.bf16.msra.mxu0 0
      %1026 = vmatprep.mubr.bf16.mxu0 0
      %1027 = vmatmul.mubr.bf16.gmra.mxu0 %v992
      %v1028 = vpop.f32.mrf.mxu0
      %v1029 = vadd.f32 0.0, %v1028
      %v1030 = vpop.f32.mrf.mxu0
      %v1031 = vadd.f32 0.0, %v1030
      %v1032 = vpop.f32.mrf.mxu0
      %v1033 = vpop.f32.mrf.mxu0
      %1034 = vdwg.mxu0
      %v1035 = vadd.f32 %v988, %v1029
      %v1036 = vadd.f32 %v989, %v1031
      %v1037 = vmul.f32 %v1035, %v395
      %v1038 = vmul.f32 %v1036, %v396
      %v1039 = vtanh.pop %v1037
      %v1040 = vtanh.pop %v1038
      %v1041 = vmul.f32 %v1039, %v395
      %v1042 = vmul.f32 %v1040, %v396
      %v1043 = vadd.f32 %v1041, %v397
      %v1044 = vadd.f32 %v1042, %v398
      %v1045 = vmul.f32 %v1043, %v978
      %1047 = vrot.lane.b32.xlu0 %v1044, 64
      %v1048 = vpop.permute.xlu0 %1047
      %v1050 = vmul.f32 %v1043, %v1048
      %1052 = vrot.lane.b32.xlu0 %v1050, 64
      %v1053 = vpop.permute.xlu0 %1052
      %v1055 = vadd.f32 %v1045, %v1053
      %v1056 = vtanh.pop %v1055
      %1058 = vrot.lane.b32.xlu0 %v1056, 64
      %v1059 = vpop.permute.xlu0 %1058
      %v1061 = vmul.f32 %v1044, %v1059
      %1062 = vst.msk [vmem:[#allocation3] sm:$0xff] %vm447, %v1061
      %1064 = vrot.lane.b32.xlu0 %v1055, 64
      %v1065 = vpop.permute.xlu0 %1064
      %1067 = vst.msk [vmem:[#allocation4] sm:$0xff] %vm447, %v1065
      %p1068 = scmp.eq.s32.totalorder %s15, 1
      // Predicated region
      $region41: #{lstm_model_forward.1} parent=35 // pred_check
        %p1069 = pneg %p1068
      $region42: #{lstm_model_forward.1} parent=35 // pred_check_branch
        %1071 = sbr.rel (%p1069) target = $region44
      $region43: #{lstm_model_forward.1} parent=35 // pred_region
        %1072 = vst.msk [vmem:[%s4] sm:$0xff] %vm447, %v1061
      $region44: #{lstm_model_forward.1} parent=35 // pred_fallthru
        _
      // Predicated region
      $region45: #{lstm_model_forward.1} parent=35 // pred_check
        %p1073 = pneg %p117
      $region46: #{lstm_model_forward.1} parent=35 // pred_check_branch
        %1075 = sbr.rel (%p1073) target = $region48
      $region47: #{lstm_model_forward.1} parent=35 // pred_region
        _
      $region48: #{lstm_model_forward.1} parent=35 // pred_fallthru
        _
      // Predicated region
      $region49: #{lstm_model_forward.1} parent=35 // pred_check
        %p1076 = pneg %p117
      $region50: #{lstm_model_forward.1} parent=35 // pred_check_branch
        %1078 = sbr.rel (%p1076) target = $region52
      $region51: #{lstm_model_forward.1} parent=35 // pred_region
        _
      $region52: #{lstm_model_forward.1} parent=35 // pred_fallthru
        _
    $region36: #{lstm_model_forward.1} parent=5 // pred_fallthru
      _
    %p1079 = scmp.le.s32.totalorder 2, %s10
    // Predicated region
    $region53: #{lstm_model_forward.1} parent=5 // pred_check
      %p1080 = pneg %p1079
    $region54: #{lstm_model_forward.1} parent=5 // pred_check_branch
      %1082 = sbr.rel (%p1080) target = $region56
    $region55: #{lstm_model_forward.1} parent=5 // pred_region
      %s1083 = ssub.s32 %s10, 2
    $region56: #{lstm_model_forward.1} parent=5 // pred_fallthru
      _
  $region6: #{lstm_model_forward.1} parent=0 // loop_footer
    %s14 = sadd.s32 1, %s10
  $region7: #{lstm_model_forward.1} parent=0 // loop_footer_branch
    %9 = sbr.rel target = $region3
  $region8: #{lstm_model_forward.1} parent=0 // loop_exit
    _

</llo_original>
